<compile_context>
chip_gen: v6e
topology: v6e:2x2x1
jax: 0.10.0
libtpu: 0.0.40
codegen_flags: <defaults>
</compile_context>

<pallas_src>
import functools

import jax
import jax.numpy as jnp
from jax.experimental import pallas as pl
from jax.experimental.pallas import tpu as pltpu


def _layernorm_kernel(x_ref, g_ref, b_ref, o_ref, *, eps):
    # Reduction is over axis=1 (channels) in both layouts:
    #   3-D blocks: (nb, C, hw_tile)        g/b: (1, C, 1)
    #   4-D blocks: (nb, C, rows_tile, 128) g/b: (1, C, 1, 128)
    x = x_ref[...].astype(jnp.float32)
    mean = jnp.mean(x, axis=1, keepdims=True)
    xc = x - mean
    var = jnp.mean(xc * xc, axis=1, keepdims=True)           # unbiased=False
    # One reciprocal per lane-vector instead of a full (C, HW) divide.
    inv = pl.reciprocal(var + eps, approx=False)
    g = g_ref[...].astype(jnp.float32)
    b = b_ref[...].astype(jnp.float32)
    o_ref[...] = (xc * inv * g + b).astype(o_ref.dtype)


def _round_up(v, m):
    return (v + m - 1) // m * m


def _vmem_budget():
    """(per-grid-step working-set budget, vmem_limit_bytes) for this chip."""
    try:
        cap = int(pltpu.get_tpu_info().vmem_capacity_bytes)
    except Exception:
        cap = 64 << 20  # conservative default: v7x per-TensorCore VMEM
    cap = max(cap, 32 << 20)
    # Working set per step: 4 pipelined I/O buffers (2x in + 2x out) plus
    # ~3 block-sized f32 temporaries inside the body.  Keep that under half of
    # physical VMEM and set the scoped limit to 3/4 of physical.
    return cap // 2, cap * 3 // 4


def _plan(N, C, HW, itemsize):
    budget, vmem_limit = _vmem_budget()
    # Bytes one block element costs: 4 pipelined copies at input dtype plus
    # ~3 f32 temporaries in the kernel body.
    cost_per_elem = 4 * itemsize + 3 * 4
    max_block_elems = max(128, budget // cost_per_elem)

    # Minimum sublane tile for this dtype (f32: 8, bf16: 16, 8-bit: 32).
    min_sub = 8 if itemsize >= 4 else (16 if itemsize == 2 else 32)

    rows = HW // 128
    use_4d = (HW % 128 == 0) and (rows >= min_sub)

    if use_4d:
        # (nb, C, rows_tile, 128): C leads (not a vreg dim) -> no sublane
        # padding for small C; reduce over C is cross-vreg VPU adds.
        per_row_elems = C * 128
        max_rows = max(min_sub, max_block_elems // per_row_elems)
        rows_tile = rows if max_rows >= rows else max(
            min_sub, max_rows // min_sub * min_sub)
        n_hw_blocks = pl.cdiv(rows, rows_tile)
        per_batch_elems = C * rows_tile * 128
        hw_tile = None
    else:
        # (nb, C, hw_tile): C maps to sublanes (padded to min_sub), HW to lanes.
        c_pad = _round_up(C, min_sub)
        max_lanes = max(128, (max_block_elems // c_pad) // 128 * 128)
        if HW < 128:
            hw_tile = HW                       # equal to full dim -> legal block
        else:
            hw_lanes = _round_up(HW, 128)      # align to 128 only, never to tile
            hw_tile = hw_lanes if max_lanes >= hw_lanes else max_lanes
        n_hw_blocks = pl.cdiv(HW, hw_tile)
        per_batch_elems = _round_up(C, min_sub) * hw_tile
        rows_tile = None

    # Fold batch elements to amortize the ~0.35us per-grid-step overhead, but
    # keep >= 2 grid steps so both v7x TensorCores get work (no-op on 1-TC chips).
    nb_cap = max(1, max_block_elems // per_batch_elems)
    min_steps = min(2, N * n_hw_blocks)
    nb = 1
    for d in range(min(N, nb_cap), 0, -1):
        if N % d == 0 and (N // d) * n_hw_blocks >= min_steps:
            nb = d
            break

    return dict(use_4d=use_4d, nb=nb, rows_tile=rows_tile, hw_tile=hw_tile,
                n_hw_blocks=n_hw_blocks, vmem_limit=vmem_limit)


def layernorm(x, g, b, eps=1e-05):
    """x: (N, C, H, W); g, b broadcastable to (1, C, 1, 1)."""
    N, C, H, W = x.shape
    HW = H * W
    itemsize = jnp.dtype(x.dtype).itemsize
    p = _plan(N, C, HW, itemsize)
    nb = p["nb"]
    grid = (N // nb, p["n_hw_blocks"])
    kernel = functools.partial(_layernorm_kernel, eps=eps)
    cparams = pltpu.CompilerParams(
        dimension_semantics=("parallel", "parallel"),
        vmem_limit_bytes=p["vmem_limit"],
    )

    if p["use_4d"]:
        rows = HW // 128
        rt = p["rows_tile"]
        x_in = x.reshape(N, C, rows, 128)                 # contiguous split: free
        # Lane-replicated params -> no per-step 1-lane broadcast/relayout.
        g_in = jnp.broadcast_to(jnp.reshape(g, (1, C, 1, 1)), (1, C, 1, 128))
        b_in = jnp.broadcast_to(jnp.reshape(b, (1, C, 1, 1)), (1, C, 1, 128))
        out = pl.pallas_call(
            kernel,
            out_shape=jax.ShapeDtypeStruct((N, C, rows, 128), x.dtype),
            grid_spec=pltpu.PrefetchScalarGridSpec(
                num_scalar_prefetch=0,
                grid=grid,
                in_specs=[
                    pl.BlockSpec((nb, C, rt, 128), lambda i, j: (i, 0, j, 0)),
                    pl.BlockSpec((1, C, 1, 128), lambda i, j: (0, 0, 0, 0)),
                    pl.BlockSpec((1, C, 1, 128), lambda i, j: (0, 0, 0, 0)),
                ],
                out_specs=pl.BlockSpec((nb, C, rt, 128),
                                       lambda i, j: (i, 0, j, 0)),
            ),
            compiler_params=cparams,
        )(x_in, g_in, b_in)
    else:
        ht = p["hw_tile"]
        x_in = x.reshape(N, C, HW)                        # contiguous flatten: free
        g_in = jnp.reshape(g, (1, C, 1))
        b_in = jnp.reshape(b, (1, C, 1))
        out = pl.pallas_call(
            kernel,
            out_shape=jax.ShapeDtypeStruct((N, C, HW), x.dtype),
            grid_spec=pltpu.PrefetchScalarGridSpec(
                num_scalar_prefetch=0,
                grid=grid,
                in_specs=[
                    pl.BlockSpec((nb, C, ht), lambda i, j: (i, 0, j)),
                    pl.BlockSpec((1, C, 1), lambda i, j: (0, 0, 0)),
                    pl.BlockSpec((1, C, 1), lambda i, j: (0, 0, 0)),
                ],
                out_specs=pl.BlockSpec((nb, C, ht), lambda i, j: (i, 0, j)),
            ),
            compiler_params=cparams,
        )(x_in, g_in, b_in)

    return out.reshape(N, C, H, W)


def _reference(x, g, b, eps):
    mean = jnp.mean(x, axis=1, keepdims=True)
    var = jnp.mean((x - mean) ** 2, axis=1, keepdims=True)
    return (x - mean) / (var + eps) * g + b


if __name__ == "__main__":
    key = jax.random.PRNGKey(0)
    eps = 1e-05

    # Primary shape from the module spec (exercises the 3-D lane-dense path).
    N, C, H, W = 2, 4, 16, 16
    k1, k2, k3 = jax.random.split(key, 3)
    x = jax.random.normal(k1, (N, C, H, W), dtype=jnp.float32)
    g = jnp.ones((1, C, 1, 1), dtype=jnp.float32)   # nn.Parameter(torch.ones)
    b = jnp.zeros((1, C, 1, 1), dtype=jnp.float32)  # nn.Parameter(torch.zeros)
    out = layernorm(x, g, b, eps=eps)
    jax.block_until_ready(out)
    assert jnp.allclose(out, _reference(x, g, b, eps), atol=1e-5, rtol=1e-5), \
        "mismatch vs reference (3-D path)"

    # Secondary shape exercising the 4-D (nb, C, rows, 128) small-C layout.
    N2, C2, H2, W2 = 2, 8, 32, 32
    x2 = jax.random.normal(k2, (N2, C2, H2, W2), dtype=jnp.float32)
    g2 = 1.0 + 0.1 * jax.random.normal(k3, (1, C2, 1, 1), dtype=jnp.float32)
    b2 = 0.1 * jnp.arange(C2, dtype=jnp.float32).reshape(1, C2, 1, 1)
    out2 = layernorm(x2, g2, b2, eps=eps)
    jax.block_until_ready(out2)
    assert jnp.allclose(out2, _reference(x2, g2, b2, eps), atol=1e-5, rtol=1e-5), \
        "mismatch vs reference (4-D path)"

    print("KERNEL_OK")
</pallas_src>

<mosaic_0001>
module attributes {stable_mosaic.version = 11 : i64} {
  func.func @_layernorm_kernel(%arg0: i32, %arg1: i32, %arg2: memref<1x4x256xf32, #tpu.memory_space<vmem>>, %arg3: memref<1x4x1xf32, #tpu.memory_space<vmem>>, %arg4: memref<1x4x1xf32, #tpu.memory_space<vmem>>, %arg5: memref<1x4x256xf32, #tpu.memory_space<vmem>>) attributes {dimension_semantics = [#tpu.dimension_semantics<parallel>, #tpu.dimension_semantics<parallel>], iteration_bounds = array<i64: 2, 1>, scalar_prefetch = 0 : i64, scratch_operands = 0 : i64, tpu.core_type = #tpu.core_type<tc>, window_params = [{transform_indices = @transform_0, window_bounds = array<i64: 1, 4, 256>}, {pipeline_mode = #tpu.pipeline_mode<synchronous>, transform_indices = @transform_1, window_bounds = array<i64: 1, 4, 1>}, {pipeline_mode = #tpu.pipeline_mode<synchronous>, transform_indices = @transform_2, window_bounds = array<i64: 1, 4, 1>}, {transform_indices = @transform_3, window_bounds = array<i64: 1, 4, 256>}]} {
    %c0 = arith.constant 0 : index
    %c0_0 = arith.constant 0 : index
    %c0_1 = arith.constant 0 : index
    %0 = vector.load %arg2[%c0, %c0_0, %c0_1] : memref<1x4x256xf32, #tpu.memory_space<vmem>>, vector<1x4x256xf32>
    %cst = arith.constant dense<0.000000e+00> : vector<1x256xf32>
    %1 = vector.multi_reduction <add>, %0, %cst [1] : vector<1x4x256xf32> to vector<1x256xf32>
    %2 = vector.shape_cast %1 : vector<1x256xf32> to vector<1x1x256xf32>
    %cst_2 = arith.constant 4.000000e+00 : f32
    %3 = vector.broadcast %cst_2 : f32 to vector<1x1x256xf32>
    %4 = arith.divf %2, %3 : vector<1x1x256xf32>
    %5 = vector.broadcast %4 : vector<1x1x256xf32> to vector<1x4x256xf32>
    %6 = arith.subf %0, %5 : vector<1x4x256xf32>
    %7 = arith.mulf %6, %6 : vector<1x4x256xf32>
    %cst_3 = arith.constant dense<0.000000e+00> : vector<1x256xf32>
    %8 = vector.multi_reduction <add>, %7, %cst_3 [1] : vector<1x4x256xf32> to vector<1x256xf32>
    %9 = vector.shape_cast %8 : vector<1x256xf32> to vector<1x1x256xf32>
    %cst_4 = arith.constant 4.000000e+00 : f32
    %10 = vector.broadcast %cst_4 : f32 to vector<1x1x256xf32>
    %11 = arith.divf %9, %10 : vector<1x1x256xf32>
    %cst_5 = arith.constant 9.99999974E-6 : f32
    %12 = vector.broadcast %cst_5 : f32 to vector<1x1x256xf32>
    %13 = arith.addf %11, %12 : vector<1x1x256xf32>
    %14 = tpu.reciprocal %13 : vector<1x1x256xf32> -> vector<1x1x256xf32>
    %c0_6 = arith.constant 0 : index
    %c0_7 = arith.constant 0 : index
    %c0_8 = arith.constant 0 : index
    %15 = vector.load %arg3[%c0_6, %c0_7, %c0_8] : memref<1x4x1xf32, #tpu.memory_space<vmem>>, vector<1x4x1xf32>
    %c0_9 = arith.constant 0 : index
    %c0_10 = arith.constant 0 : index
    %c0_11 = arith.constant 0 : index
    %16 = vector.load %arg4[%c0_9, %c0_10, %c0_11] : memref<1x4x1xf32, #tpu.memory_space<vmem>>, vector<1x4x1xf32>
    %17 = vector.broadcast %14 : vector<1x1x256xf32> to vector<1x4x256xf32>
    %18 = arith.mulf %6, %17 : vector<1x4x256xf32>
    %19 = vector.broadcast %15 : vector<1x4x1xf32> to vector<1x4x256xf32>
    %20 = arith.mulf %18, %19 : vector<1x4x256xf32>
    %21 = vector.broadcast %16 : vector<1x4x1xf32> to vector<1x4x256xf32>
    %22 = arith.addf %20, %21 : vector<1x4x256xf32>
    %c0_12 = arith.constant 0 : index
    %c0_13 = arith.constant 0 : index
    %c0_14 = arith.constant 0 : index
    %23 = vector.load %arg5[%c0_12, %c0_13, %c0_14] : memref<1x4x256xf32, #tpu.memory_space<vmem>>, vector<1x4x256xf32>
    tpu.vector_store %arg5[%c0_12, %c0_13, %c0_14], %22 {strides = array<i32>} : memref<1x4x256xf32, #tpu.memory_space<vmem>>, vector<1x4x256xf32>,
    return
  }
  func.func @transform_0(%arg0: i32, %arg1: i32) -> (i32, i32, i32) {
    %c0_i32 = arith.constant 0 : i32
    %c0_i32_0 = arith.constant 0 : i32
    return %arg0, %c0_i32, %arg1 : i32, i32, i32
  }
  func.func @transform_1(%arg0: i32, %arg1: i32) -> (i32, i32, i32) {
    %c0_i32 = arith.constant 0 : i32
    %c0_i32_0 = arith.constant 0 : i32
    %c0_i32_1 = arith.constant 0 : i32
    %c0_i32_2 = arith.constant 0 : i32
    return %c0_i32, %c0_i32_0, %c0_i32_1 : i32, i32, i32
  }
  func.func @transform_2(%arg0: i32, %arg1: i32) -> (i32, i32, i32) {
    %c0_i32 = arith.constant 0 : i32
    %c0_i32_0 = arith.constant 0 : i32
    %c0_i32_1 = arith.constant 0 : i32
    %c0_i32_2 = arith.constant 0 : i32
    return %c0_i32, %c0_i32_0, %c0_i32_1 : i32, i32, i32
  }
  func.func @transform_3(%arg0: i32, %arg1: i32) -> (i32, i32, i32) {
    %c0_i32 = arith.constant 0 : i32
    %c0_i32_0 = arith.constant 0 : i32
    return %arg0, %c0_i32, %arg1 : i32, i32, i32
  }
}

</mosaic_0001>

<llo_original>
// kernel: tpu_custom_call.1
$region0: #{tpu_custom_call.1}
  #allocation0 [shape = 'u32[]', space=smem, size = 0x4, offset = 0x4, fixed_abs, tag = 'smem constant byte address 0x4 - core index']
  #allocation1 [shape = 'u32[144,128]{1,0:T(1,128)}', space=vmem, size = 0x12000, scoped, tag = 'internal scratch']
  %s0 = inlined_call_operand.hbm [shape: f32[2,4,256], index: 0, kind: input, shape index: {}]
  %s1 = inlined_call_operand.vmem [shape: f32[1,4,1], index: 1, kind: input, shape index: {}]
  %s2 = inlined_call_operand.vmem [shape: f32[1,4,1], index: 2, kind: input, shape index: {}]
  %s3 = inlined_call_operand.hbm [shape: f32[2,4,256], index: 3, kind: output, shape index: {}]
  %s4 = sld [smem:[#allocation0]]
  $region49: #{tpu_custom_call.1} parent=0
    _
  %s6 = ssub.s32 1, %s4
  %s7 = scalar_select 0, %s6, %s4
  $region1: #{tpu_custom_call.1} parent=0
    #allocation2 [shape = 'u8[8192]{0}', space=vmem, size = 0x2000, scoped, tag = 'input window, operand 0']
    #allocation3 [shape = 's32[2]{0}', space=sflag, size = 0x8, scoped, tag = 'scoped memory for tpu_custom_call.1']
    #allocation4 [shape = 's32[2]{0}', space=sflag, size = 0x8, scoped, tag = 'scoped memory for tpu_custom_call.1']
    #allocation5 [shape = 'u8[8192]{0}', space=vmem, size = 0x2000, scoped, tag = 'output window, operand 0']
    %8 = vsyncpa [#allocation3], 0
    %s9 = scalar_lea.sflag [#allocation3], 1
    %10 = vsyncpa %s9, 0
    %11 = vsyncpa [#allocation4], 0
    %s12 = scalar_lea.sflag [#allocation4], 1
    %13 = vsyncpa %s12, 0
    loop: start=0, step=1, limit=4
    $region2: #{tpu_custom_call.1} parent=1 // loop_pre_header
      _
    $region3: #{tpu_custom_call.1} parent=1 // loop_header
      %s15 = sphi 0, %s19
      %p16 = scmp.ge.s32.totalorder %s15, 4
      %s22 = sphi 0, %s34
      %s23 = sphi 0, %s30
      %s24 = sphi 0, %s22
      %s25 = sphi 0, %s23
      %s26 = sphi 0, %s24
      %s27 = sphi 0, %s25
      %s39 = sphi 0, %s41
      %s42 = sphi 0, %s39
      %s43 = sphi 0, %s42
      %s59 = sphi 0, %s43
      %s63 = sphi 0, %s63
      %s65 = sphi 0, %s63
      %s66 = sphi 0, %s65
      %s80 = sphi 0, %s66
      %s84 = sphi 0, %s84
      %s86 = sphi 0, %s84
      %s87 = sphi 0, %s86
      %s101 = sphi 0, %s87
      %s109 = sphi 0, %s111
      %s112 = sphi 0, %s109
      %s113 = sphi 0, %s112
      %s129 = sphi 0, %s113
    $region4: #{tpu_custom_call.1} parent=1 // loop_header_branch
      %18 = sbr.rel (%p16) target = $region8
    $region5: #{tpu_custom_call.1} parent=1 // loop_body
      %s20 = ssub.s32 %s15, 1
      %s21 = ssub.s32 %s15, 2
      %s28 = sadd.s32 1, %s23
      %p29 = scmp.ge.s32.totalorder %s28, 1
      %s30 = scalar_select %p29, 0, %s28
      %s31 = sadd.s32 1, %s22
      %s32 = scalar_select %p29, %s31, %s22
      %p33 = scmp.ge.s32.totalorder %s32, 2
      %s34 = scalar_select %p33, 0, %s32
      %s35 = ssub.s32 %s22, %s34
      %s36 = ssub.s32 %s23, %s30
      %s37 = sor.u32 %s35, %s36
      %p38 = scmp.eq.s32.totalorder %s37, 0
      %s40 = sadd.s32 %s39, 1
      %s41 = scalar_select %p38, %s39, %s40
      %p44 = pneg %p38
      %p45 = scmp.eq.s32.totalorder %s15, 1
      %p46 = por %p44, %p45
      %p47 = scmp.ne.s32.totalorder %s39, %s42
      %p48 = scmp.eq.s32.totalorder %s15, 0
      %p49 = por %p47, %p48
      %p50 = scmp.ne.s32.totalorder %s39, %s42
      %p51 = scmp.eq.s32.totalorder %s20, 1
      %p52 = por %p50, %p51
      %p53 = scmp.ne.s32.totalorder %s42, %s43
      %p54 = scmp.eq.s32.totalorder %s20, 0
      %p55 = por %p53, %p54
      %p56 = scmp.ne.s32.totalorder %s42, %s43
      %p57 = scmp.eq.s32.totalorder %s21, 1
      %p58 = por %p56, %p57
      %p60 = scmp.ne.s32.totalorder %s43, %s59
      %p61 = scmp.eq.s32.totalorder %s21, 0
      %p62 = por %p60, %p61
      %s64 = sadd.s32 %s63, 1
      %p67 = scmp.eq.s32.totalorder %s15, 1
      %p68 = scmp.ne.s32.totalorder %s63, %s65
      %p69 = scmp.eq.s32.totalorder %s15, 0
      %p70 = por %p68, %p69
      %p71 = scmp.ne.s32.totalorder %s63, %s65
      %p72 = scmp.eq.s32.totalorder %s20, 1
      %p73 = por %p71, %p72
      %p74 = scmp.ne.s32.totalorder %s65, %s66
      %p75 = scmp.eq.s32.totalorder %s20, 0
      %p76 = por %p74, %p75
      %p77 = scmp.ne.s32.totalorder %s65, %s66
      %p78 = scmp.eq.s32.totalorder %s21, 1
      %p79 = por %p77, %p78
      %p81 = scmp.ne.s32.totalorder %s66, %s80
      %p82 = scmp.eq.s32.totalorder %s21, 0
      %p83 = por %p81, %p82
      %s85 = sadd.s32 %s84, 1
      %p88 = scmp.eq.s32.totalorder %s15, 1
      %p89 = scmp.ne.s32.totalorder %s84, %s86
      %p90 = scmp.eq.s32.totalorder %s15, 0
      %p91 = por %p89, %p90
      %p92 = scmp.ne.s32.totalorder %s84, %s86
      %p93 = scmp.eq.s32.totalorder %s20, 1
      %p94 = por %p92, %p93
      %p95 = scmp.ne.s32.totalorder %s86, %s87
      %p96 = scmp.eq.s32.totalorder %s20, 0
      %p97 = por %p95, %p96
      %p98 = scmp.ne.s32.totalorder %s86, %s87
      %p99 = scmp.eq.s32.totalorder %s21, 1
      %p100 = por %p98, %p99
      %p102 = scmp.ne.s32.totalorder %s87, %s101
      %p103 = scmp.eq.s32.totalorder %s21, 0
      %p104 = por %p102, %p103
      %s105 = ssub.s32 %s22, %s34
      %s106 = ssub.s32 %s23, %s30
      %s107 = sor.u32 %s105, %s106
      %p108 = scmp.eq.s32.totalorder %s107, 0
      %s110 = sadd.s32 %s109, 1
      %s111 = scalar_select %p108, %s109, %s110
      %p114 = pneg %p108
      %p115 = scmp.eq.s32.totalorder %s15, 1
      %p116 = por %p114, %p115
      %p117 = scmp.ne.s32.totalorder %s109, %s112
      %p118 = scmp.eq.s32.totalorder %s15, 0
      %p119 = por %p117, %p118
      %p120 = scmp.ne.s32.totalorder %s109, %s112
      %p121 = scmp.eq.s32.totalorder %s20, 1
      %p122 = por %p120, %p121
      %p123 = scmp.ne.s32.totalorder %s112, %s113
      %p124 = scmp.eq.s32.totalorder %s20, 0
      %p125 = por %p123, %p124
      %p126 = scmp.ne.s32.totalorder %s112, %s113
      %p127 = scmp.eq.s32.totalorder %s21, 1
      %p128 = por %p126, %p127
      %p130 = scmp.ne.s32.totalorder %s113, %s129
      %p131 = scmp.eq.s32.totalorder %s21, 0
      %p132 = por %p130, %p131
      %p133 = scmp.le.s32.totalorder 1, %s15
      %p134 = scmp.lt.s32.totalorder %s15, 3
      %p135 = pnand %p133, %p134
      %p136 = pneg %p135
      // Predicated region
      $region9: #{tpu_custom_call.1} parent=5 // pred_check
        _
      $region10: #{tpu_custom_call.1} parent=5 // pred_check_branch
        %138 = sbr.rel (%p135) target = $region12
      $region11: #{tpu_custom_call.1} parent=5 // pred_region
        %s139 = ssub.s32 %s15, 1
        // Predicated region
        $region13: #{tpu_custom_call.1} parent=11 // pred_check
          %p140 = pneg %p76
        $region14: #{tpu_custom_call.1} parent=11 // pred_check_branch
          %142 = sbr.rel (%p140) target = $region16
        $region15: #{tpu_custom_call.1} parent=11 // pred_region
          _
        $region16: #{tpu_custom_call.1} parent=11 // pred_fallthru
          _
        // Predicated region
        $region17: #{tpu_custom_call.1} parent=11 // pred_check
          %p143 = pneg %p97
        $region18: #{tpu_custom_call.1} parent=11 // pred_check_branch
          %145 = sbr.rel (%p143) target = $region20
        $region19: #{tpu_custom_call.1} parent=11 // pred_region
          _
        $region20: #{tpu_custom_call.1} parent=11 // pred_fallthru
          _
      $region12: #{tpu_custom_call.1} parent=5 // pred_fallthru
        _
      %p146 = scmp.lt.s32.totalorder %s15, 2
      // Predicated region
      $region21: #{tpu_custom_call.1} parent=5 // pred_check
        %p147 = pneg %p146
      $region22: #{tpu_custom_call.1} parent=5 // pred_check_branch
        %149 = sbr.rel (%p147) target = $region24
      $region23: #{tpu_custom_call.1} parent=5 // pred_region
        // Predicated region
        $region25: #{tpu_custom_call.1} parent=23 // pred_check
          %p150 = pneg %p49
        $region26: #{tpu_custom_call.1} parent=23 // pred_check_branch
          %152 = sbr.rel (%p150) target = $region28
        $region27: #{tpu_custom_call.1} parent=23 // pred_region
          %s153 = sand.u32 %s39, 1
          %s154 = scalar_lea.sflag [#allocation3], %s153
          %s155 = sand.u32 %s39, 1
          %s156 = smul.addr %s155, 8
          %s157 = scalar_lea.vmem [#allocation2], %s156
          %s158 = smul.u32 2, %s23
          %s160 = ssub.s32 128, 128
          %161 = vsyncadd %s154, %s160
          %s162 = smul.addr %s22, 2
          %s163 = sadd.s32 %s158, %s162
          %s164 = smul.addr %s163, 64
          %s165 = scalar_lea.hbm %s0, %s164
          %s167 = sshll.u32 %s157, 4
          %s168 = int_to_ptr.vmem [resolvable:$true] %s167
          %170 = dma.hbm_to_vmem [thread:$0]  %s165, 128, %s168, %s154
        $region28: #{tpu_custom_call.1} parent=23 // pred_fallthru
          _
      $region24: #{tpu_custom_call.1} parent=5 // pred_fallthru
        _
      %p171 = scmp.le.s32.totalorder 1, %s15
      %p172 = scmp.lt.s32.totalorder %s15, 3
      %p173 = pnand %p171, %p172
      %p174 = pneg %p173
      // Predicated region
      $region29: #{tpu_custom_call.1} parent=5 // pred_check
        _
      $region30: #{tpu_custom_call.1} parent=5 // pred_check_branch
        %176 = sbr.rel (%p173) target = $region32
      $region31: #{tpu_custom_call.1} parent=5 // pred_region
        %s177 = ssub.s32 %s15, 1
        %s178 = sand.u32 %s42, 1
        %s179 = scalar_lea.sflag [#allocation3], %s178
        %s180 = sand.u32 %s42, 1
        %s181 = smul.addr %s180, 8
        %s182 = scalar_lea.vmem [#allocation2], %s181
        // Predicated region
        $region33: #{tpu_custom_call.1} parent=31 // pred_check
          %p183 = pneg %p55
        $region34: #{tpu_custom_call.1} parent=31 // pred_check_branch
          %185 = sbr.rel (%p183) target = $region36
        $region35: #{tpu_custom_call.1} parent=31 // pred_region
          %186 = dma.done %s179, 128
        $region36: #{tpu_custom_call.1} parent=31 // pred_fallthru
          _
        %s187 = sand.u32 %s42, 1
        %s188 = scalar_lea.sflag [#allocation3], %s187
        %s189 = sand.u32 %s42, 1
        %s190 = smul.addr %s189, 8
        %s191 = scalar_lea.vmem [#allocation2], %s190
        %p192 = pneg %p55
        %p193 = pneg %p52
        %p194 = pneg %p76
        %p195 = pneg %p73
        %p196 = pneg %p97
        %p197 = pneg %p94
        %p198 = pneg %p125
        %p199 = pneg %p122
        %s200 = sand.u32 %s112, 1
        %s201 = scalar_lea.sflag [#allocation4], %s200
        %s202 = sand.u32 %s112, 1
        %s203 = smul.addr %s202, 8
        %s204 = scalar_lea.vmem [#allocation5], %s203
        %s205 = smul.u32 2, %s25
        %s206 = smul.u32 2, %s25
        %v207 = vld [vmem:[%s182] sm:$0xff]
        %v209 = vcombine.high %v207, %v207
        %vm211 = vcmask 1043456
        %v212 = vsel %vm211, %v207, 0.0
        %v213 = vrot.slane %v212, 4
        %v214 = vadd.f32 %v212, %v213
        %v215 = vrot.slane %v214, 2
        %v216 = vadd.f32 %v214, %v215
        %v217 = vrot.slane %v216, 1
        %v218 = vadd.f32 %v216, %v217
        %v219 = vsel %vm211, %v209, 0.0
        %v220 = vrot.slane %v219, 4
        %v221 = vadd.f32 %v219, %v220
        %v222 = vrot.slane %v221, 2
        %v223 = vadd.f32 %v221, %v222
        %v224 = vrot.slane %v223, 1
        %v225 = vadd.f32 %v223, %v224
        %v226 = vrcp.pop 4.0
        %v227 = vmul.f32 %v218, %v226
        %v228 = vmul.f32 %v225, %v226
        %v231 = vcombine.low %v227, %v228
        %v233 = vsub.f32 %v207, %v231
        %v234 = vmul.f32 %v233, %v233
        %v236 = vcombine.high %v234, %v234
        %v238 = vsel %vm211, %v234, 0.0
        %v239 = vrot.slane %v238, 4
        %v240 = vadd.f32 %v238, %v239
        %v241 = vrot.slane %v240, 2
        %v242 = vadd.f32 %v240, %v241
        %v243 = vrot.slane %v242, 1
        %v244 = vadd.f32 %v242, %v243
        %v245 = vsel %vm211, %v236, 0.0
        %v246 = vrot.slane %v245, 4
        %v247 = vadd.f32 %v245, %v246
        %v248 = vrot.slane %v247, 2
        %v249 = vadd.f32 %v247, %v248
        %v250 = vrot.slane %v249, 1
        %v251 = vadd.f32 %v249, %v250
        %v252 = vmul.f32 %v244, %v226
        %v253 = vmul.f32 %v251, %v226
        %v254 = vadd.f32 %v252, 1e-05
        %v255 = vadd.f32 %v253, 1e-05
        %v256 = vrcp.pop %v254
        %v257 = vrcp.pop %v255
        %v258 = vld [vmem:[%s1] sm:$0xf]
        %v259 = vld [vmem:[%s2] sm:$0xf]
        %v262 = vcombine.low %v256, %v257
        %v264 = vmul.f32 %v233, %v262
        %266 = vset.pattern.permute.xlu0 0
        %267 = vperm.xlu0 %266, %v258
        %v268 = vpop.permute.xlu0 %267
        %v270 = vunpack.c.l.s4 839922192
        %v271 = vunpack.c.0.s8 %v270
        %v272 = vlaneseq
        %v273 = vshrl.u32 %v272, 7
        %v274 = vsub.s32 %v271, %v273
        %v275 = vrot.slane %v268, %v274
        %v277 = vmul.f32 %v264, %v275
        %279 = vset.pattern.permute.xlu0 0
        %280 = vperm.xlu0 %279, %v259
        %v281 = vpop.permute.xlu0 %280
        %v283 = vunpack.c.l.s4 839922192
        %v284 = vunpack.c.0.s8 %v283
        %v285 = vlaneseq
        %v286 = vshrl.u32 %v285, 7
        %v287 = vsub.s32 %v284, %v286
        %v288 = vrot.slane %v281, %v287
        %v290 = vadd.f32 %v277, %v288
        %291 = vst [vmem:[%s204] sm:$0xff] %v290
        %s292 = sand.u32 %s112, 1
        %s293 = scalar_lea.sflag [#allocation4], %s292
        %s294 = sand.u32 %s112, 1
        %s295 = smul.addr %s294, 8
        %s296 = scalar_lea.vmem [#allocation5], %s295
        // Predicated region
        $region37: #{tpu_custom_call.1} parent=31 // pred_check
          %p297 = pneg %p122
        $region38: #{tpu_custom_call.1} parent=31 // pred_check_branch
          %299 = sbr.rel (%p297) target = $region40
        $region39: #{tpu_custom_call.1} parent=31 // pred_region
          %s300 = smul.u32 2, %s25
          %s302 = ssub.s32 128, 128
          %303 = vsyncadd %s293, %s302
          %s304 = smul.addr %s24, 2
          %s305 = sadd.s32 %s300, %s304
          %s306 = smul.addr %s305, 64
          %s307 = scalar_lea.hbm %s3, %s306
          %s309 = sshll.u32 %s296, 4
          %s310 = int_to_ptr.vmem [resolvable:$true] %s309
          %312 = dma.vmem_to_hbm [thread:$0]  %s310, 128, %s307, %s293
        $region40: #{tpu_custom_call.1} parent=31 // pred_fallthru
          _
      $region32: #{tpu_custom_call.1} parent=5 // pred_fallthru
        _
      %p313 = scmp.le.s32.totalorder 2, %s15
      // Predicated region
      $region41: #{tpu_custom_call.1} parent=5 // pred_check
        %p314 = pneg %p313
      $region42: #{tpu_custom_call.1} parent=5 // pred_check_branch
        %316 = sbr.rel (%p314) target = $region44
      $region43: #{tpu_custom_call.1} parent=5 // pred_region
        %s317 = ssub.s32 %s15, 2
        // Predicated region
        $region45: #{tpu_custom_call.1} parent=43 // pred_check
          %p318 = pneg %p128
        $region46: #{tpu_custom_call.1} parent=43 // pred_check_branch
          %320 = sbr.rel (%p318) target = $region48
        $region47: #{tpu_custom_call.1} parent=43 // pred_region
          %s321 = sand.u32 %s113, 1
          %s322 = scalar_lea.sflag [#allocation4], %s321
          %s323 = sand.u32 %s113, 1
          %s324 = smul.addr %s323, 8
          %s325 = scalar_lea.vmem [#allocation5], %s324
          %326 = dma.done %s322, 128
        $region48: #{tpu_custom_call.1} parent=43 // pred_fallthru
          _
      $region44: #{tpu_custom_call.1} parent=5 // pred_fallthru
        _
    $region6: #{tpu_custom_call.1} parent=1 // loop_footer
      %s19 = sadd.s32 1, %s15
    $region7: #{tpu_custom_call.1} parent=1 // loop_footer_branch
      %14 = sbr.rel target = $region3
    $region8: #{tpu_custom_call.1} parent=1 // loop_exit
      _
    %327 = vsyncpa [#allocation3], 1
    %s328 = scalar_lea.sflag [#allocation3], 1
    %329 = vsyncpa %s328, 1
    %330 = vsyncpa [#allocation4], 1
    %s331 = scalar_lea.sflag [#allocation4], 1
    %332 = vsyncpa %s331, 1

</llo_original>
